<compile_context>
chip_gen: v7x
topology: tpu7x:2x2x1
jax: 0.10.0
libtpu: 0.0.40
codegen_flags: <defaults>
</compile_context>

<pallas_src>
import functools

import jax
import jax.numpy as jnp
import numpy as np
from jax.experimental import pallas as pl
from jax.experimental.pallas import tpu as pltpu


def _choose_hw_tile(hw, target):
    """Largest multiple of 8 that divides hw and is <= target (falls back to hw)."""
    if hw <= target or hw % 8 != 0:
        return hw
    t = (min(target, hw) // 8) * 8
    while t > 8 and hw % t != 0:
        t -= 8
    return t if (t > 0 and hw % t == 0) else hw
# TODO(synk): pad + mask the tail HW tile instead of falling back to tile == HW for
# resolutions with no nice multiple-of-8 divisor (rare for Swin stages).


# ---------------------------------------------------------------------------
# Shared in-kernel helper: sim = x @ kfold + row_bias ; per-head softmax ; y = p @ vbdw + wb
# ---------------------------------------------------------------------------
def _attention_y(x, kfold, row_bias, vbdw, wb, *, n_l, num_heads):
    f32 = jnp.float32
    sim = jnp.dot(x, kfold, preferred_element_type=f32) + row_bias          # (tile, hn) f32
    parts = []
    for h in range(num_heads):                                              # static, small
        s = sim[:, h * n_l:(h + 1) * n_l]                                   # (tile, n_l)
        m = jnp.max(s, axis=-1, keepdims=True)                              # per-head max
        e = jnp.exp(s - m)
        d = jnp.sum(e, axis=-1, keepdims=True)                              # >= 1 by construction
        parts.append(e * pl.reciprocal(d, approx=True))
    p = parts[0] if num_heads == 1 else jnp.concatenate(parts, axis=-1)     # (tile, hn)
    y = jnp.dot(p.astype(jnp.bfloat16), vbdw, preferred_element_type=f32) + wb  # (tile, val_c)
    return y


# ---------------------------------------------------------------------------
# Pass 1: per-channel sum / sum-of-squares of q = x @ Wq + bq  (q InstanceNorm stats).
# ---------------------------------------------------------------------------
def _qstats_kernel(x_ref, wq_ref, bq_ref, qsum_ref, qsq_ref):
    t = pl.program_id(1)
    q = jnp.dot(x_ref[...], wq_ref[...],
                preferred_element_type=jnp.float32) + bq_ref[...]           # (tile, key_c) f32

    @pl.when(t == 0)
    def _init():
        qsum_ref[...] = jnp.zeros_like(qsum_ref)
        qsq_ref[...] = jnp.zeros_like(qsq_ref)

    qsum_ref[...] += jnp.sum(q, axis=0, keepdims=True)
    qsq_ref[...] += jnp.sum(q * q, axis=0, keepdims=True)


# ---------------------------------------------------------------------------
# Pass 2: attention with folded K/V; emits only per-batch statistics of y = W(att).
# ---------------------------------------------------------------------------
def _ystats_kernel(x_ref, kf_ref, rb_ref, vw_ref, wb_ref, ysum_ref, ysq_ref,
                   *, n_l, num_heads):
    t = pl.program_id(1)
    y = _attention_y(x_ref[...], kf_ref[...], rb_ref[...], vw_ref[...], wb_ref[...],
                     n_l=n_l, num_heads=num_heads)                          # (tile, val_c) f32

    @pl.when(t == 0)
    def _init():
        ysum_ref[...] = jnp.zeros_like(ysum_ref)
        ysq_ref[...] = jnp.zeros_like(ysq_ref)

    ysum_ref[...] += jnp.sum(y, axis=0, keepdims=True)
    ysq_ref[...] += jnp.sum(y * y, axis=0, keepdims=True)


# ---------------------------------------------------------------------------
# Pass 3: recompute y, apply its InstanceNorm, vis_project(GELU) * lang, project_mm(GELU).
# ---------------------------------------------------------------------------
def _fuse_kernel(x_ref, kf_ref, rb_ref, vw_ref, wb_ref, ym_ref, yi_ref,
                 wv_ref, bv_ref, wp_ref, bp_ref, out_ref, *, n_l, num_heads):
    f32 = jnp.float32
    x = x_ref[...]
    y = _attention_y(x, kf_ref[...], rb_ref[...], vw_ref[...], wb_ref[...],
                     n_l=n_l, num_heads=num_heads)                          # (tile, val_c) f32
    lang = (y - ym_ref[...]) * yi_ref[...]                                  # InstanceNorm apply
    vis = jax.nn.gelu(jnp.dot(x, wv_ref[...], preferred_element_type=f32) + bv_ref[...],
                      approximate=True)                                     # (tile, dim)
    mm = (vis * lang).astype(jnp.bfloat16)                                  # dim == val_c
    out = jnp.dot(mm, wp_ref[...], preferred_element_type=f32) + bp_ref[...]
    out_ref[...] = jax.nn.gelu(out, approximate=True).astype(out_ref.dtype)


# ---------------------------------------------------------------------------
# Wrapper
# ---------------------------------------------------------------------------
def pwam_forward(x, l, l_mask, params, *, num_heads, tile_hw=512, eps=1e-5,
                 vmem_limit_bytes=None):
    """PWAM forward.  x: (B, HW, dim); l: (B, l_in, N_l); l_mask: (B, N_l, 1).
    Returns (B, HW, value_channels)."""
    f32, bf16 = jnp.float32, jnp.bfloat16
    hp = jax.lax.Precision.HIGHEST
    B, HW, dim = x.shape
    l_in, n_l = int(l.shape[1]), int(l.shape[2])
    key_c = int(params["fq_w"].shape[1])
    val_c = int(params["fv_w"].shape[1])
    assert dim == val_c, "PWAM requires dim == value_channels (vis * lang fusion)"
    assert num_heads >= 1 and key_c % num_heads == 0 and val_c % num_heads == 0
    kd, vd = key_c // num_heads, val_c // num_heads
    hn = num_heads * n_l
    scale = float(key_c) ** -0.5

    x_bf = x.astype(bf16)                               # bf16 MXU inputs, f32 accumulation
    wq = params["fq_w"].astype(bf16)
    bq = params["fq_b"].astype(f32)                     # (1, key_c)
    wvis = params["vis_w"].astype(bf16)
    bvis = params["vis_b"].astype(f32)
    wpm = params["pm_w"].astype(bf16)
    pmb = params["pm_b"].astype(f32)
    wb = params["w_b"].astype(f32)                      # (1, val_c)

    tile = _choose_hw_tile(HW, tile_hw)
    n_tiles = HW // tile
    grid = (B, n_tiles)

    x_spec = pl.BlockSpec((None, tile, dim), lambda b, t: (b, t, 0))

    def per_batch(r, c):
        return pl.BlockSpec((None, r, c), lambda b, t: (b, 0, 0))

    def shared(r, c):
        return pl.BlockSpec((r, c), lambda b, t: (0, 0))

    def cparams(sem):
        kw = dict(dimension_semantics=sem)
        if vmem_limit_bytes is not None:
            kw["vmem_limit_bytes"] = int(vmem_limit_bytes)
        return pltpu.CompilerParams(**kw)

    red_params = cparams(("parallel", "arbitrary"))
    par_params = cparams(("parallel", "parallel"))

    # ---- pass 1: q InstanceNorm statistics over the full HW axis ----
    qsum, qsq = pl.pallas_call(
        _qstats_kernel,
        out_shape=(jax.ShapeDtypeStruct((B, 1, key_c), f32),
                   jax.ShapeDtypeStruct((B, 1, key_c), f32)),
        grid=grid,
        in_specs=[x_spec, shared(dim, key_c), shared(1, key_c)],
        out_specs=(per_batch(1, key_c), per_batch(1, key_c)),
        compiler_params=red_params,
    )(x_bf, wq, bq)

    # ---- per-batch prep in plain XLA (all tensors are tiny: n_l / key_c / val_c sized) ----
    inv_hw = 1.0 / float(HW)
    qmean = qsum[:, 0, :] * inv_hw                                        # (B, key_c)
    qvar = jnp.maximum(qsq[:, 0, :] * inv_hw - qmean * qmean, 0.0)
    qinv = jax.lax.rsqrt(qvar + eps)                                      # (B, key_c)

    lt = jnp.transpose(l, (0, 2, 1)).astype(f32)                          # (B, n_l, l_in)
    k = (jnp.einsum('bni,io->bno', lt, params["fk_w"], precision=hp)
         + params["fk_b"]) * l_mask                                       # (B, n_l, key_c)
    v = (jnp.einsum('bni,io->bno', lt, params["fv_w"], precision=hp)
         + params["fv_b"]) * l_mask                                       # (B, n_l, val_c)

    # block-diagonal, InstanceNorm- and softmax-scale-folded K^T: (B, key_c, hn)
    kmask = (jnp.arange(key_c)[:, None] // kd ==
             jnp.arange(num_heads)[None, :]).astype(f32)                  # (key_c, num_heads)
    k_sc = k * (scale * qinv)[:, None, :]                                 # (B, n_l, key_c)
    KQ = jnp.einsum('bnc,ch->bchn', k_sc, kmask,
                    precision=hp).reshape(B, key_c, hn)
    # fold the f_query conv into K: sim = x @ kfold + row_bias
    kfold = jnp.einsum('dc,bcj->bdj', params["fq_w"], KQ, precision=hp).astype(bf16)
    maskbias = 10000.0 * l_mask[:, :, 0] - 10000.0                        # (B, n_l)
    row_bias = (jnp.einsum('bc,bcj->bj', params["fq_b"] - qmean, KQ, precision=hp)
                + jnp.tile(maskbias, (1, num_heads)))[:, None, :].astype(f32)   # (B, 1, hn)

    # block-diagonal V with the W conv folded in: y = p @ vbdw + w_b
    vmask = (jnp.arange(num_heads)[:, None] ==
             jnp.arange(val_c)[None, :] // vd).astype(f32)                # (num_heads, val_c)
    Vblk = jnp.einsum('bnc,hc->bhnc', v, vmask,
                      precision=hp).reshape(B, hn, val_c)
    vbdw = jnp.einsum('bjc,co->bjo', Vblk, params["w_w"], precision=hp).astype(bf16)

    # ---- pass 2: attention; emits only the y InstanceNorm statistics (no y HBM round-trip) ----
    ystats = functools.partial(_ystats_kernel, n_l=n_l, num_heads=num_heads)
    ysum, ysq = pl.pallas_call(
        ystats,
        out_shape=(jax.ShapeDtypeStruct((B, 1, val_c), f32),
                   jax.ShapeDtypeStruct((B, 1, val_c), f32)),
        grid=grid,
        in_specs=[x_spec, per_batch(dim, hn), per_batch(1, hn),
                  per_batch(hn, val_c), shared(1, val_c)],
        out_specs=(per_batch(1, val_c), per_batch(1, val_c)),
        compiler_params=red_params,
    )(x_bf, kfold, row_bias, vbdw, wb)

    ymean = ysum[:, 0, :] * inv_hw
    yvar = jnp.maximum(ysq[:, 0, :] * inv_hw - ymean * ymean, 0.0)
    yinv = jax.lax.rsqrt(yvar + eps)[:, None, :]                          # (B, 1, val_c)
    ymean = ymean[:, None, :]                                             # (B, 1, val_c)

    # ---- pass 3: recompute y, normalize, vis * lang, project_mm (exact-width output) ----
    fuse = functools.partial(_fuse_kernel, n_l=n_l, num_heads=num_heads)
    out = pl.pallas_call(
        fuse,
        out_shape=jax.ShapeDtypeStruct((B, HW, val_c), x.dtype),
        grid=grid,
        in_specs=[x_spec, per_batch(dim, hn), per_batch(1, hn),
                  per_batch(hn, val_c), shared(1, val_c),
                  per_batch(1, val_c), per_batch(1, val_c),
                  shared(dim, dim), shared(1, dim),
                  shared(val_c, val_c), shared(1, val_c)],
        out_specs=pl.BlockSpec((None, tile, val_c), lambda b, t: (b, t, 0)),
        compiler_params=par_params,
    )(x_bf, kfold, row_bias, vbdw, wb, ymean, yinv, wvis, bvis, wpm, pmb)

    return out


# ---------------------------------------------------------------------------
# Pure-JAX reference (mirrors the PyTorch graph exactly: erf GELU, f32, HIGHEST)
# ---------------------------------------------------------------------------
def pwam_reference(x, l, l_mask, params, *, num_heads):
    hp = jax.lax.Precision.HIGHEST
    gelu = lambda z: jax.nn.gelu(z, approximate=False)

    def in1d(z):
        mean = jnp.mean(z, axis=1, keepdims=True)
        var = jnp.mean((z - mean) ** 2, axis=1, keepdims=True)
        return (z - mean) / jnp.sqrt(var + 1e-5)

    lt = jnp.transpose(l, (0, 2, 1))
    vis = gelu(jnp.einsum('bti,io->bto', x, params['vis_w'], precision=hp) + params['vis_b'])
    q = in1d(jnp.einsum('bti,io->bto', x, params['fq_w'], precision=hp) + params['fq_b'])
    k = (jnp.einsum('bni,io->bno', lt, params['fk_w'], precision=hp) + params['fk_b']) * l_mask
    v = (jnp.einsum('bni,io->bno', lt, params['fv_w'], precision=hp) + params['fv_b']) * l_mask
    B, HW, kc = q.shape
    N_l = k.shape[1]
    vc = v.shape[-1]
    kd, vd = kc // num_heads, vc // num_heads
    qh = q.reshape(B, HW, num_heads, kd).transpose(0, 2, 1, 3)
    kh = k.reshape(B, N_l, num_heads, kd).transpose(0, 2, 1, 3)
    vh = v.reshape(B, N_l, num_heads, vd).transpose(0, 2, 1, 3)
    sim = jnp.einsum('bhqd,bhnd->bhqn', qh, kh, precision=hp) * (kc ** -0.5)
    sim = sim + (10000.0 * l_mask.transpose(0, 2, 1)[:, None] - 10000.0)
    sim = jax.nn.softmax(sim, axis=-1)
    att = jnp.einsum('bhqn,bhnd->bhqd', sim, vh, precision=hp)
    att = att.transpose(0, 2, 1, 3).reshape(B, HW, vc)
    lang = in1d(jnp.einsum('bti,io->bto', att, params['w_w'], precision=hp) + params['w_b'])
    mm = vis * lang
    mm = gelu(jnp.einsum('bti,io->bto', mm, params['pm_w'], precision=hp) + params['pm_b'])
    return mm


if __name__ == "__main__":
    # Small shapes consistent with the module (dim == v_in_channels == value_channels).
    B, H, W = 2, 16, 16
    HW = H * W
    dim = 32               # v_in_channels
    l_in = 16              # l_in_channels
    key_channels = 32
    value_channels = 32
    num_heads = 2
    N_l = 8                # number of language tokens

    key = jax.random.PRNGKey(0)
    ks = jax.random.split(key, 16)

    def winit(k, cin, cout):
        return (jax.random.normal(k, (cin, cout), jnp.float32) / np.sqrt(cin)).astype(jnp.float32)

    def binit(k, cout):
        return 0.01 * jax.random.normal(k, (1, cout), jnp.float32)

    params = {
        "vis_w": winit(ks[0], dim, dim),                        "vis_b": binit(ks[1], dim),
        "fq_w":  winit(ks[2], dim, key_channels),               "fq_b":  binit(ks[3], key_channels),
        "fk_w":  winit(ks[4], l_in, key_channels),              "fk_b":  binit(ks[5], key_channels),
        "fv_w":  winit(ks[6], l_in, value_channels),            "fv_b":  binit(ks[7], value_channels),
        "w_w":   winit(ks[8], value_channels, value_channels),  "w_b":   binit(ks[9], value_channels),
        "pm_w":  winit(ks[10], value_channels, value_channels), "pm_b":  binit(ks[11], value_channels),
    }

    x = jax.random.normal(ks[12], (B, HW, dim), jnp.float32)
    l = jax.random.normal(ks[13], (B, l_in, N_l), jnp.float32)
    lengths = jnp.array([N_l, 5], dtype=jnp.int32)
    l_mask = (jnp.arange(N_l)[None, :] < lengths[:, None]).astype(jnp.float32)[..., None]  # (B, N_l, 1)

    # tile_hw=128 -> 2 HW tiles per batch element: exercises the tiled multi-pass InstanceNorm path.
    out = pwam_forward(x, l, l_mask, params, num_heads=num_heads, tile_hw=128)
    out = jax.block_until_ready(out)

    ref = pwam_reference(x, l, l_mask, params, num_heads=num_heads)
    # Tolerance covers bf16 MXU inputs, tanh-GELU (vs erf) and the approx EUP reciprocal.
    np.testing.assert_allclose(np.asarray(out), np.asarray(ref), rtol=4e-2, atol=4e-2)

    print("KERNEL_OK")
</pallas_src>

<mosaic_0001>
module attributes {stable_mosaic.version = 11 : i64} {
  func.func @_qstats_kernel(%arg0: i32, %arg1: i32, %arg2: memref<1x128x32xbf16, #tpu.memory_space<vmem>>, %arg3: memref<32x32xbf16, #tpu.memory_space<vmem>>, %arg4: memref<1x32xf32, #tpu.memory_space<vmem>>, %arg5: memref<1x1x32xf32, #tpu.memory_space<vmem>>, %arg6: memref<1x1x32xf32, #tpu.memory_space<vmem>>) attributes {dimension_semantics = [#tpu.dimension_semantics<parallel>, #tpu.dimension_semantics<arbitrary>], iteration_bounds = array<i64: 2, 2>, scalar_prefetch = 0 : i64, scratch_operands = 0 : i64, tpu.core_type = #tpu.core_type<tc>, window_params = [{transform_indices = @transform_0, window_bounds = array<i64: 1, 128, 32>}, {pipeline_mode = #tpu.pipeline_mode<synchronous>, transform_indices = @transform_1, window_bounds = array<i64: 32, 32>}, {pipeline_mode = #tpu.pipeline_mode<synchronous>, transform_indices = @transform_2, window_bounds = array<i64: 1, 32>}, {transform_indices = @transform_3, window_bounds = array<i64: 1, 1, 32>}, {transform_indices = @transform_4, window_bounds = array<i64: 1, 1, 32>}]} {
    %c0 = arith.constant 0 : index
    %c0_0 = arith.constant 0 : index
    %c0_1 = arith.constant 0 : index
    %0 = vector.load %arg2[%c0, %c0_0, %c0_1] : memref<1x128x32xbf16, #tpu.memory_space<vmem>>, vector<1x128x32xbf16>
    %1 = vector.shape_cast %0 : vector<1x128x32xbf16> to vector<128x32xbf16>
    %c0_2 = arith.constant 0 : index
    %c0_3 = arith.constant 0 : index
    %2 = vector.load %arg3[%c0_2, %c0_3] : memref<32x32xbf16, #tpu.memory_space<vmem>>, vector<32x32xbf16>
    %cst = arith.constant dense<0.000000e+00> : vector<128x32xf32>
    %3 = tpu.matmul %1, %2, %cst {dimension_numbers = #tpu.dot_dimension_numbers<[1], [0], [0], [1], [0, 0, 1, 1], [], []>} : vector<128x32xbf16>, vector<32x32xbf16>, vector<128x32xf32> -> vector<128x32xf32>
    %c0_4 = arith.constant 0 : index
    %c0_5 = arith.constant 0 : index
    %4 = vector.load %arg4[%c0_4, %c0_5] : memref<1x32xf32, #tpu.memory_space<vmem>>, vector<1x32xf32>
    %5 = vector.broadcast %4 : vector<1x32xf32> to vector<128x32xf32>
    %6 = arith.addf %3, %5 : vector<128x32xf32>
    %c0_i32 = arith.constant 0 : i32
    %7 = arith.cmpi eq, %arg1, %c0_i32 : i32
    %8 = arith.extui %7 : i1 to i32
    %c0_i32_6 = arith.constant 0 : i32
    %9 = arith.cmpi ne, %8, %c0_i32_6 : i32
    scf.if %9 {
      %cst_21 = arith.constant 0.000000e+00 : f32
      %27 = vector.broadcast %cst_21 : f32 to vector<1x32xf32>
      %c0_22 = arith.constant 0 : index
      %c0_23 = arith.constant 0 : index
      %c0_24 = arith.constant 0 : index
      %28 = vector.load %arg5[%c0_22, %c0_23, %c0_24] : memref<1x1x32xf32, #tpu.memory_space<vmem>>, vector<1x1x32xf32>
      %29 = vector.shape_cast %28 : vector<1x1x32xf32> to vector<1x32xf32>
      %30 = vector.shape_cast %27 : vector<1x32xf32> to vector<1x1x32xf32>
      tpu.vector_store %arg5[%c0_22, %c0_23, %c0_24], %30 {strides = array<i32>} : memref<1x1x32xf32, #tpu.memory_space<vmem>>, vector<1x1x32xf32>,
      %cst_25 = arith.constant 0.000000e+00 : f32
      %31 = vector.broadcast %cst_25 : f32 to vector<1x32xf32>
      %c0_26 = arith.constant 0 : index
      %c0_27 = arith.constant 0 : index
      %c0_28 = arith.constant 0 : index
      %32 = vector.load %arg6[%c0_26, %c0_27, %c0_28] : memref<1x1x32xf32, #tpu.memory_space<vmem>>, vector<1x1x32xf32>
      %33 = vector.shape_cast %32 : vector<1x1x32xf32> to vector<1x32xf32>
      %34 = vector.shape_cast %31 : vector<1x32xf32> to vector<1x1x32xf32>
      tpu.vector_store %arg6[%c0_26, %c0_27, %c0_28], %34 {strides = array<i32>} : memref<1x1x32xf32, #tpu.memory_space<vmem>>, vector<1x1x32xf32>,
    } else {
    }
    %c0_7 = arith.constant 0 : index
    %c0_8 = arith.constant 0 : index
    %c0_9 = arith.constant 0 : index
    %10 = vector.load %arg5[%c0_7, %c0_8, %c0_9] : memref<1x1x32xf32, #tpu.memory_space<vmem>>, vector<1x1x32xf32>
    %11 = vector.shape_cast %10 : vector<1x1x32xf32> to vector<1x32xf32>
    %cst_10 = arith.constant dense<0.000000e+00> : vector<32xf32>
    %12 = vector.multi_reduction <add>, %6, %cst_10 [0] : vector<128x32xf32> to vector<32xf32>
    %13 = vector.shape_cast %12 : vector<32xf32> to vector<1x32xf32>
    %14 = arith.addf %11, %13 : vector<1x32xf32>
    %c0_11 = arith.constant 0 : index
    %c0_12 = arith.constant 0 : index
    %c0_13 = arith.constant 0 : index
    %15 = vector.load %arg5[%c0_11, %c0_12, %c0_13] : memref<1x1x32xf32, #tpu.memory_space<vmem>>, vector<1x1x32xf32>
    %16 = vector.shape_cast %15 : vector<1x1x32xf32> to vector<1x32xf32>
    %17 = vector.shape_cast %14 : vector<1x32xf32> to vector<1x1x32xf32>
    tpu.vector_store %arg5[%c0_11, %c0_12, %c0_13], %17 {strides = array<i32>} : memref<1x1x32xf32, #tpu.memory_space<vmem>>, vector<1x1x32xf32>,
    %c0_14 = arith.constant 0 : index
    %c0_15 = arith.constant 0 : index
    %c0_16 = arith.constant 0 : index
    %18 = vector.load %arg6[%c0_14, %c0_15, %c0_16] : memref<1x1x32xf32, #tpu.memory_space<vmem>>, vector<1x1x32xf32>
    %19 = vector.shape_cast %18 : vector<1x1x32xf32> to vector<1x32xf32>
    %20 = arith.mulf %6, %6 : vector<128x32xf32>
    %cst_17 = arith.constant dense<0.000000e+00> : vector<32xf32>
    %21 = vector.multi_reduction <add>, %20, %cst_17 [0] : vector<128x32xf32> to vector<32xf32>
    %22 = vector.shape_cast %21 : vector<32xf32> to vector<1x32xf32>
    %23 = arith.addf %19, %22 : vector<1x32xf32>
    %c0_18 = arith.constant 0 : index
    %c0_19 = arith.constant 0 : index
    %c0_20 = arith.constant 0 : index
    %24 = vector.load %arg6[%c0_18, %c0_19, %c0_20] : memref<1x1x32xf32, #tpu.memory_space<vmem>>, vector<1x1x32xf32>
    %25 = vector.shape_cast %24 : vector<1x1x32xf32> to vector<1x32xf32>
    %26 = vector.shape_cast %23 : vector<1x32xf32> to vector<1x1x32xf32>
    tpu.vector_store %arg6[%c0_18, %c0_19, %c0_20], %26 {strides = array<i32>} : memref<1x1x32xf32, #tpu.memory_space<vmem>>, vector<1x1x32xf32>,
    return
  }
  func.func @transform_0(%arg0: i32, %arg1: i32) -> (i32, i32, i32) {
    %c0_i32 = arith.constant 0 : i32
    %c0_i32_0 = arith.constant 0 : i32
    return %arg0, %arg1, %c0_i32 : i32, i32, i32
  }
  func.func @transform_1(%arg0: i32, %arg1: i32) -> (i32, i32) {
    %c0_i32 = arith.constant 0 : i32
    %c0_i32_0 = arith.constant 0 : i32
    %c0_i32_1 = arith.constant 0 : i32
    return %c0_i32, %c0_i32_0 : i32, i32
  }
  func.func @transform_2(%arg0: i32, %arg1: i32) -> (i32, i32) {
    %c0_i32 = arith.constant 0 : i32
    %c0_i32_0 = arith.constant 0 : i32
    %c0_i32_1 = arith.constant 0 : i32
    return %c0_i32, %c0_i32_0 : i32, i32
  }
  func.func @transform_3(%arg0: i32, %arg1: i32) -> (i32, i32, i32) {
    %c0_i32 = arith.constant 0 : i32
    %c0_i32_0 = arith.constant 0 : i32
    %c0_i32_1 = arith.constant 0 : i32
    return %arg0, %c0_i32, %c0_i32_0 : i32, i32, i32
  }
  func.func @transform_4(%arg0: i32, %arg1: i32) -> (i32, i32, i32) {
    %c0_i32 = arith.constant 0 : i32
    %c0_i32_0 = arith.constant 0 : i32
    %c0_i32_1 = arith.constant 0 : i32
    return %arg0, %c0_i32, %c0_i32_0 : i32, i32, i32
  }
}

</mosaic_0001>

<llo_original>
// kernel: tpu_custom_call.1
$region0: #{tpu_custom_call.1}
  #allocation0 [shape = 'u32[]', space=smem, size = 0x4, offset = 0x4, fixed_abs, tag = 'smem constant byte address 0x4 - core index']
  #allocation1 [shape = 'u32[144,128]{1,0:T(1,128)}', space=vmem, size = 0x12000, scoped, tag = 'internal scratch']
  %s0 = inlined_call_operand.vmem [shape: bf16[2,256,32], index: 0, kind: input, shape index: {}]
  %s1 = inlined_call_operand.vmem [shape: bf16[32,32], index: 1, kind: input, shape index: {}]
  %s2 = inlined_call_operand.vmem [shape: f32[1,32], index: 2, kind: input, shape index: {}]
  %s3 = inlined_call_operand.hbm [shape: f32[2,1,32], index: 3, kind: output, shape index: {0}]
  %s4 = inlined_call_operand.hbm [shape: f32[2,1,32], index: 4, kind: output, shape index: {1}]
  %5 = xla_tuple %s3, %s4
  %s6 = sld [smem:[#allocation0]]
  $region57: #{tpu_custom_call.1} parent=0
    _
  %s8 = ssub.s32 1, %s6
  %s9 = scalar_select 0, %s8, %s6
  $region1: #{tpu_custom_call.1} parent=0
    #allocation2 [shape = 'u8[1024]{0}', space=vmem, size = 0x400, scoped, tag = 'output window, operand 0']
    #allocation3 [shape = 's32[2]{0}', space=sflag, size = 0x8, scoped, tag = 'scoped memory for tpu_custom_call.1']
    #allocation4 [shape = 'u8[1024]{0}', space=vmem, size = 0x400, scoped, tag = 'output window, operand 1']
    #allocation5 [shape = 's32[2]{0}', space=sflag, size = 0x8, scoped, tag = 'scoped memory for tpu_custom_call.1']
    %10 = vsyncpa [#allocation3], 0
    %s11 = scalar_lea.sflag [#allocation3], 1
    %12 = vsyncpa %s11, 0
    %13 = vsyncpa [#allocation5], 0
    %s14 = scalar_lea.sflag [#allocation5], 1
    %15 = vsyncpa %s14, 0
    loop: start=0, step=1, limit=6
    $region2: #{tpu_custom_call.1} parent=1 // loop_pre_header
      _
    $region3: #{tpu_custom_call.1} parent=1 // loop_header
      %s17 = sphi 0, %s21
      %p18 = scmp.ge.s32.totalorder %s17, 6
      %s24 = sphi 0, %s36
      %s25 = sphi 0, %s32
      %s26 = sphi 0, %s24
      %s27 = sphi 0, %s25
      %s28 = sphi 0, %s26
      %s29 = sphi 0, %s27
      %s41 = sphi 0, %s43
      %s44 = sphi 0, %s41
      %s45 = sphi 0, %s44
      %s61 = sphi 0, %s45
      %s65 = sphi 0, %s65
      %s67 = sphi 0, %s65
      %s68 = sphi 0, %s67
      %s82 = sphi 0, %s68
      %s86 = sphi 0, %s86
      %s88 = sphi 0, %s86
      %s89 = sphi 0, %s88
      %s103 = sphi 0, %s89
      %s109 = sphi 0, %s111
      %s112 = sphi 0, %s109
      %s113 = sphi 0, %s112
      %s129 = sphi 0, %s113
      %s135 = sphi 0, %s137
      %s138 = sphi 0, %s135
      %s139 = sphi 0, %s138
      %s155 = sphi 0, %s139
    $region4: #{tpu_custom_call.1} parent=1 // loop_header_branch
      %20 = sbr.rel (%p18) target = $region8
    $region5: #{tpu_custom_call.1} parent=1 // loop_body
      %s22 = ssub.s32 %s17, 1
      %s23 = ssub.s32 %s17, 2
      %s30 = sadd.s32 1, %s25
      %p31 = scmp.ge.s32.totalorder %s30, 2
      %s32 = scalar_select %p31, 0, %s30
      %s33 = sadd.s32 1, %s24
      %s34 = scalar_select %p31, %s33, %s24
      %p35 = scmp.ge.s32.totalorder %s34, 2
      %s36 = scalar_select %p35, 0, %s34
      %s37 = ssub.s32 %s24, %s36
      %s38 = ssub.s32 %s25, %s32
      %s39 = sor.u32 %s37, %s38
      %p40 = scmp.eq.s32.totalorder %s39, 0
      %s42 = sadd.s32 %s41, 1
      %s43 = scalar_select %p40, %s41, %s42
      %p46 = pneg %p40
      %p47 = scmp.eq.s32.totalorder %s17, 3
      %p48 = por %p46, %p47
      %p49 = scmp.ne.s32.totalorder %s41, %s44
      %p50 = scmp.eq.s32.totalorder %s17, 0
      %p51 = por %p49, %p50
      %p52 = scmp.ne.s32.totalorder %s41, %s44
      %p53 = scmp.eq.s32.totalorder %s22, 3
      %p54 = por %p52, %p53
      %p55 = scmp.ne.s32.totalorder %s44, %s45
      %p56 = scmp.eq.s32.totalorder %s22, 0
      %p57 = por %p55, %p56
      %p58 = scmp.ne.s32.totalorder %s44, %s45
      %p59 = scmp.eq.s32.totalorder %s23, 3
      %p60 = por %p58, %p59
      %p62 = scmp.ne.s32.totalorder %s45, %s61
      %p63 = scmp.eq.s32.totalorder %s23, 0
      %p64 = por %p62, %p63
      %s66 = sadd.s32 %s65, 1
      %p69 = scmp.eq.s32.totalorder %s17, 3
      %p70 = scmp.ne.s32.totalorder %s65, %s67
      %p71 = scmp.eq.s32.totalorder %s17, 0
      %p72 = por %p70, %p71
      %p73 = scmp.ne.s32.totalorder %s65, %s67
      %p74 = scmp.eq.s32.totalorder %s22, 3
      %p75 = por %p73, %p74
      %p76 = scmp.ne.s32.totalorder %s67, %s68
      %p77 = scmp.eq.s32.totalorder %s22, 0
      %p78 = por %p76, %p77
      %p79 = scmp.ne.s32.totalorder %s67, %s68
      %p80 = scmp.eq.s32.totalorder %s23, 3
      %p81 = por %p79, %p80
      %p83 = scmp.ne.s32.totalorder %s68, %s82
      %p84 = scmp.eq.s32.totalorder %s23, 0
      %p85 = por %p83, %p84
      %s87 = sadd.s32 %s86, 1
      %p90 = scmp.eq.s32.totalorder %s17, 3
      %p91 = scmp.ne.s32.totalorder %s86, %s88
      %p92 = scmp.eq.s32.totalorder %s17, 0
      %p93 = por %p91, %p92
      %p94 = scmp.ne.s32.totalorder %s86, %s88
      %p95 = scmp.eq.s32.totalorder %s22, 3
      %p96 = por %p94, %p95
      %p97 = scmp.ne.s32.totalorder %s88, %s89
      %p98 = scmp.eq.s32.totalorder %s22, 0
      %p99 = por %p97, %p98
      %p100 = scmp.ne.s32.totalorder %s88, %s89
      %p101 = scmp.eq.s32.totalorder %s23, 3
      %p102 = por %p100, %p101
      %p104 = scmp.ne.s32.totalorder %s89, %s103
      %p105 = scmp.eq.s32.totalorder %s23, 0
      %p106 = por %p104, %p105
      %s107 = ssub.s32 %s24, %s36
      %p108 = scmp.eq.s32.totalorder %s107, 0
      %s110 = sadd.s32 %s109, 1
      %s111 = scalar_select %p108, %s109, %s110
      %p114 = pneg %p108
      %p115 = scmp.eq.s32.totalorder %s17, 3
      %p116 = por %p114, %p115
      %p117 = scmp.ne.s32.totalorder %s109, %s112
      %p118 = scmp.eq.s32.totalorder %s17, 0
      %p119 = por %p117, %p118
      %p120 = scmp.ne.s32.totalorder %s109, %s112
      %p121 = scmp.eq.s32.totalorder %s22, 3
      %p122 = por %p120, %p121
      %p123 = scmp.ne.s32.totalorder %s112, %s113
      %p124 = scmp.eq.s32.totalorder %s22, 0
      %p125 = por %p123, %p124
      %p126 = scmp.ne.s32.totalorder %s112, %s113
      %p127 = scmp.eq.s32.totalorder %s23, 3
      %p128 = por %p126, %p127
      %p130 = scmp.ne.s32.totalorder %s113, %s129
      %p131 = scmp.eq.s32.totalorder %s23, 0
      %p132 = por %p130, %p131
      %s133 = ssub.s32 %s24, %s36
      %p134 = scmp.eq.s32.totalorder %s133, 0
      %s136 = sadd.s32 %s135, 1
      %s137 = scalar_select %p134, %s135, %s136
      %p140 = pneg %p134
      %p141 = scmp.eq.s32.totalorder %s17, 3
      %p142 = por %p140, %p141
      %p143 = scmp.ne.s32.totalorder %s135, %s138
      %p144 = scmp.eq.s32.totalorder %s17, 0
      %p145 = por %p143, %p144
      %p146 = scmp.ne.s32.totalorder %s135, %s138
      %p147 = scmp.eq.s32.totalorder %s22, 3
      %p148 = por %p146, %p147
      %p149 = scmp.ne.s32.totalorder %s138, %s139
      %p150 = scmp.eq.s32.totalorder %s22, 0
      %p151 = por %p149, %p150
      %p152 = scmp.ne.s32.totalorder %s138, %s139
      %p153 = scmp.eq.s32.totalorder %s23, 3
      %p154 = por %p152, %p153
      %p156 = scmp.ne.s32.totalorder %s139, %s155
      %p157 = scmp.eq.s32.totalorder %s23, 0
      %p158 = por %p156, %p157
      %p159 = scmp.le.s32.totalorder 1, %s17
      %p160 = scmp.lt.s32.totalorder %s17, 5
      %p161 = pnand %p159, %p160
      %p162 = pneg %p161
      // Predicated region
      $region9: #{tpu_custom_call.1} parent=5 // pred_check
        _
      $region10: #{tpu_custom_call.1} parent=5 // pred_check_branch
        %164 = sbr.rel (%p161) target = $region12
      $region11: #{tpu_custom_call.1} parent=5 // pred_region
        %s165 = ssub.s32 %s17, 1
        // Predicated region
        $region13: #{tpu_custom_call.1} parent=11 // pred_check
          %p166 = pneg %p78
        $region14: #{tpu_custom_call.1} parent=11 // pred_check_branch
          %168 = sbr.rel (%p166) target = $region16
        $region15: #{tpu_custom_call.1} parent=11 // pred_region
          _
        $region16: #{tpu_custom_call.1} parent=11 // pred_fallthru
          _
        // Predicated region
        $region17: #{tpu_custom_call.1} parent=11 // pred_check
          %p169 = pneg %p99
        $region18: #{tpu_custom_call.1} parent=11 // pred_check_branch
          %171 = sbr.rel (%p169) target = $region20
        $region19: #{tpu_custom_call.1} parent=11 // pred_region
          _
        $region20: #{tpu_custom_call.1} parent=11 // pred_fallthru
          _
      $region12: #{tpu_custom_call.1} parent=5 // pred_fallthru
        _
      %p172 = scmp.lt.s32.totalorder %s17, 4
      // Predicated region
      $region21: #{tpu_custom_call.1} parent=5 // pred_check
        %p173 = pneg %p172
      $region22: #{tpu_custom_call.1} parent=5 // pred_check_branch
        %175 = sbr.rel (%p173) target = $region24
      $region23: #{tpu_custom_call.1} parent=5 // pred_region
        // Predicated region
        $region25: #{tpu_custom_call.1} parent=23 // pred_check
          %p176 = pneg %p51
        $region26: #{tpu_custom_call.1} parent=23 // pred_check_branch
          %178 = sbr.rel (%p176) target = $region28
        $region27: #{tpu_custom_call.1} parent=23 // pred_region
          %s179 = smul.u32 16, %s25
          %p180 = scmp.lt.s32.totalorder %s24, 1
          %s181 = scalar_select %p180, %s24, 1
          %p182 = scmp.lt.s32.totalorder %s179, 31
          %s183 = scalar_select %p182, %s179, 31
          %s184 = smul.addr %s181, 32
          %s185 = sadd.s32 %s183, %s184
          %s186 = smul.addr %s185, 4
          %s187 = scalar_lea.vmem %s0, %s186
          %s188 = smul.u32 16, %s25
        $region28: #{tpu_custom_call.1} parent=23 // pred_fallthru
          _
      $region24: #{tpu_custom_call.1} parent=5 // pred_fallthru
        _
      %p189 = scmp.le.s32.totalorder 1, %s17
      %p190 = scmp.lt.s32.totalorder %s17, 5
      %p191 = pnand %p189, %p190
      %p192 = pneg %p191
      // Predicated region
      $region29: #{tpu_custom_call.1} parent=5 // pred_check
        _
      $region30: #{tpu_custom_call.1} parent=5 // pred_check_branch
        %194 = sbr.rel (%p191) target = $region32
      $region31: #{tpu_custom_call.1} parent=5 // pred_region
        %s195 = ssub.s32 %s17, 1
        %s196 = smul.u32 16, %s27
        %p197 = scmp.lt.s32.totalorder %s26, 1
        %s198 = scalar_select %p197, %s26, 1
        %p199 = scmp.lt.s32.totalorder %s196, 31
        %s200 = scalar_select %p199, %s196, 31
        %s201 = smul.addr %s198, 32
        %s202 = sadd.s32 %s200, %s201
        %s203 = smul.addr %s202, 4
        %s204 = scalar_lea.vmem %s0, %s203
        %p205 = pneg %p57
        %p206 = pneg %p54
        %p207 = pneg %p78
        %p208 = pneg %p75
        %p209 = pneg %p99
        %p210 = pneg %p96
        %p211 = pneg %p125
        %p212 = pneg %p122
        %s213 = sand.u32 %s112, 1
        %s214 = scalar_lea.sflag [#allocation3], %s213
        %s215 = sand.u32 %s112, 1
        %s216 = scalar_lea.vmem [#allocation2], %s215
        %p217 = pneg %p151
        %p218 = pneg %p148
        %s219 = sand.u32 %s138, 1
        %s220 = scalar_lea.sflag [#allocation5], %s219
        %s221 = sand.u32 %s138, 1
        %s222 = scalar_lea.vmem [#allocation4], %s221
        %s223 = smul.u32 16, %s27
        %p224 = scmp.lt.s32.totalorder %s26, 1
        %s225 = scalar_select %p224, %s26, 1
        %p226 = scmp.lt.s32.totalorder %s223, 31
        %s227 = scalar_select %p226, %s223, 31
        %s228 = smul.addr %s225, 32
        %s229 = sadd.s32 %s227, %s228
        %s230 = smul.addr %s229, 4
        %s231 = scalar_lea.vmem %s0, %s230
        %s232 = smul.u32 16, %s27
        %v234 = vld [vmem:[%s231] sm:$0xf]
        %v235 = vld [vmem:[%s231 + $0x4] sm:$0xf]
        %v236 = vld [vmem:[%s231 + $0x8] sm:$0xf]
        %v237 = vld [vmem:[%s231 + $0xc] sm:$0xf]
        %v238 = vld [vmem:[%s231 + $0x10] sm:$0xf]
        %v239 = vld [vmem:[%s231 + $0x14] sm:$0xf]
        %v240 = vld [vmem:[%s231 + $0x18] sm:$0xf]
        %v241 = vld [vmem:[%s231 + $0x1c] sm:$0xf]
        %v242 = vld [vmem:[%s231 + $0x20] sm:$0xf]
        %v243 = vld [vmem:[%s231 + $0x24] sm:$0xf]
        %v244 = vld [vmem:[%s231 + $0x28] sm:$0xf]
        %v245 = vld [vmem:[%s231 + $0x2c] sm:$0xf]
        %v246 = vld [vmem:[%s231 + $0x30] sm:$0xf]
        %v247 = vld [vmem:[%s231 + $0x34] sm:$0xf]
        %v248 = vld [vmem:[%s231 + $0x38] sm:$0xf]
        %v249 = vld [vmem:[%s231 + $0x3c] sm:$0xf]
        %v250 = vld [vmem:[%s1] sm:$0xf]
        %v251 = vld [vmem:[%s1 + $0x4] sm:$0xf]
        %v252 = vld [vmem:[%s1 + $0x8] sm:$0xf]
        %v253 = vld [vmem:[%s1 + $0xc] sm:$0xf]
        %v254 = vld [vmem:[%s2] sm:$0x1]
        %v256 = vlaneseq
        %v257 = vshrl.u32 %v256, 7
        %v258 = vsub.s32 0, %v257
        %v259 = vrot.slane %v254, %v258
        %v277 = vunpack.c.l.b16 %v234
        %v278 = vunpack.c.l.b16 %v235
        %v279 = vunpack.c.l.b16 %v236
        %v280 = vunpack.c.l.b16 %v237
        %v281 = vunpack.c.l.b16 %v238
        %v282 = vunpack.c.l.b16 %v239
        %v283 = vunpack.c.l.b16 %v240
        %v284 = vunpack.c.l.b16 %v241
        %v285 = vunpack.c.l.b16 %v242
        %v286 = vunpack.c.l.b16 %v243
        %v287 = vunpack.c.l.b16 %v244
        %v288 = vunpack.c.l.b16 %v245
        %v289 = vunpack.c.l.b16 %v246
        %v290 = vunpack.c.l.b16 %v247
        %v291 = vunpack.c.l.b16 %v248
        %v292 = vunpack.c.l.b16 %v249
        %v293 = vpack.c.b16 %v278, %v277
        %v294 = vpack.c.b16 %v280, %v279
        %v295 = vpack.c.b16 %v282, %v281
        %v296 = vpack.c.b16 %v284, %v283
        %v297 = vpack.c.b16 %v286, %v285
        %v298 = vpack.c.b16 %v288, %v287
        %v299 = vpack.c.b16 %v290, %v289
        %v300 = vpack.c.b16 %v292, %v291
        %v305 = vunpack.c.l.b16 %v250
        %v306 = vunpack.c.l.b16 %v251
        %v307 = vunpack.c.l.b16 %v252
        %v308 = vunpack.c.l.b16 %v253
        %v309 = vpack.c.b16 %v306, %v305
        %v310 = vpack.c.b16 %v308, %v307
        %vm313 = vcmask 261120
        %v315 = vsel %vm313, %v293, 0
        %v318 = vsel %vm313, %v294, 0
        %v321 = vsel %vm313, %v295, 0
        %v324 = vsel %vm313, %v296, 0
        %v327 = vsel %vm313, %v297, 0
        %v330 = vsel %vm313, %v298, 0
        %v333 = vsel %vm313, %v299, 0
        %v336 = vsel %vm313, %v300, 0
        %338 = vmatprep.subr.bf16.mxu0 0
        %339 = vmatpush1.bf16.msra.mxu0 %v309
        %340 = vmatprep.subr.bf16.mxu0 0
        %341 = vmatpush1.bf16.msra.mxu0 %v310
        %342 = vmatprep.subr.bf16.mxu0 0
        %343 = vmatpush1.bf16.msra.mxu0 0
        %344 = vmatprep.subr.bf16.mxu0 0
        %345 = vmatpush1.bf16.msra.mxu0 0
        %346 = vmatprep.subr.bf16.mxu0 0
        %347 = vmatpush1.bf16.msra.mxu0 0
        %348 = vmatprep.subr.bf16.mxu0 0
        %349 = vmatpush1.bf16.msra.mxu0 0
        %350 = vmatprep.subr.bf16.mxu0 0
        %351 = vmatpush1.bf16.msra.mxu0 0
        %352 = vmatprep.subr.bf16.mxu0 0
        %353 = vmatpush1.bf16.msra.mxu0 0
        %354 = vmatprep.subr.bf16.mxu0 0
        %355 = vmatpush1.bf16.msra.mxu0 0
        %356 = vmatprep.subr.bf16.mxu0 0
        %357 = vmatpush1.bf16.msra.mxu0 0
        %358 = vmatprep.subr.bf16.mxu0 0
        %359 = vmatpush1.bf16.msra.mxu0 0
        %360 = vmatprep.subr.bf16.mxu0 0
        %361 = vmatpush1.bf16.msra.mxu0 0
        %362 = vmatprep.subr.bf16.mxu0 0
        %363 = vmatpush1.bf16.msra.mxu0 0
        %364 = vmatprep.subr.bf16.mxu0 0
        %365 = vmatpush1.bf16.msra.mxu0 0
        %366 = vmatprep.subr.bf16.mxu0 0
        %367 = vmatpush1.bf16.msra.mxu0 0
        %368 = vmatprep.subr.bf16.mxu0 0
        %369 = vmatpush1.bf16.msra.mxu0 0
        %370 = vmatprep.mubr.bf16.mxu0 0
        %371 = vmatmul.mubr.bf16.gmra.mrb[0].mxu0 %v315
        %v372 = vpop.f32.mrb[0].mxu0
        %v373 = vadd.f32 %v259, %v372
        %v374 = vpop.f32.mrb[0].mxu0
        %v375 = vpop.f32.mrb[0].mxu0
        %v376 = vadd.f32 %v259, %v375
        %v377 = vpop.f32.mrb[0].mxu0
        %378 = vmatprep.mubr.bf16.mxu0 0
        %379 = vmatmul.mubr.bf16.gmra.mrb[0].mxu0 %v318
        %v380 = vpop.f32.mrb[0].mxu0
        %v381 = vadd.f32 %v259, %v380
        %v382 = vpop.f32.mrb[0].mxu0
        %v383 = vpop.f32.mrb[0].mxu0
        %v384 = vadd.f32 %v259, %v383
        %v385 = vpop.f32.mrb[0].mxu0
        %386 = vmatprep.mubr.bf16.mxu0 0
        %387 = vmatmul.mubr.bf16.gmra.mrb[0].mxu0 %v321
        %v388 = vpop.f32.mrb[0].mxu0
        %v389 = vadd.f32 %v259, %v388
        %v390 = vpop.f32.mrb[0].mxu0
        %v391 = vpop.f32.mrb[0].mxu0
        %v392 = vadd.f32 %v259, %v391
        %v393 = vpop.f32.mrb[0].mxu0
        %394 = vmatprep.mubr.bf16.mxu0 0
        %395 = vmatmul.mubr.bf16.gmra.mrb[0].mxu0 %v324
        %v396 = vpop.f32.mrb[0].mxu0
        %v397 = vadd.f32 %v259, %v396
        %v398 = vpop.f32.mrb[0].mxu0
        %v399 = vpop.f32.mrb[0].mxu0
        %v400 = vadd.f32 %v259, %v399
        %v401 = vpop.f32.mrb[0].mxu0
        %402 = vmatprep.mubr.bf16.mxu0 0
        %403 = vmatmul.mubr.bf16.gmra.mrb[0].mxu0 %v327
        %v404 = vpop.f32.mrb[0].mxu0
        %v405 = vadd.f32 %v259, %v404
        %v406 = vpop.f32.mrb[0].mxu0
        %v407 = vpop.f32.mrb[0].mxu0
        %v408 = vadd.f32 %v259, %v407
        %v409 = vpop.f32.mrb[0].mxu0
        %410 = vmatprep.mubr.bf16.mxu0 0
        %411 = vmatmul.mubr.bf16.gmra.mrb[0].mxu0 %v330
        %v412 = vpop.f32.mrb[0].mxu0
        %v413 = vadd.f32 %v259, %v412
        %v414 = vpop.f32.mrb[0].mxu0
        %v415 = vpop.f32.mrb[0].mxu0
        %v416 = vadd.f32 %v259, %v415
        %v417 = vpop.f32.mrb[0].mxu0
        %418 = vmatprep.mubr.bf16.mxu0 0
        %419 = vmatmul.mubr.bf16.gmra.mrb[0].mxu0 %v333
        %v420 = vpop.f32.mrb[0].mxu0
        %v421 = vadd.f32 %v259, %v420
        %v422 = vpop.f32.mrb[0].mxu0
        %v423 = vpop.f32.mrb[0].mxu0
        %v424 = vadd.f32 %v259, %v423
        %v425 = vpop.f32.mrb[0].mxu0
        %426 = vmatprep.mubr.bf16.mxu0 0
        %427 = vmatmul.mubr.bf16.gmra.mrb[0].mxu0 %v336
        %v428 = vpop.f32.mrb[0].mxu0
        %v429 = vadd.f32 %v259, %v428
        %v430 = vpop.f32.mrb[0].mxu0
        %v431 = vpop.f32.mrb[0].mxu0
        %v432 = vadd.f32 %v259, %v431
        %v433 = vpop.f32.mrb[0].mxu0
        %434 = vdwg.mxu0
        %p435 = scmp.eq.s32.totalorder %s27, 0
        // Predicated region
        $region33: #{tpu_custom_call.1} parent=31 // pred_check
          %p436 = pneg %p435
        $region34: #{tpu_custom_call.1} parent=31 // pred_check_branch
          %438 = sbr.rel (%p436) target = $region36
        $region35: #{tpu_custom_call.1} parent=31 // pred_region
          %vm439 = vcmask 253952
          %440 = vst.msk [vmem:[%s216] sm:$0x1] %vm439, 0.0
          %441 = vst.msk [vmem:[%s222] sm:$0x1] %vm439, 0.0
        $region36: #{tpu_custom_call.1} parent=31 // pred_fallthru
          _
        %v442 = vld [vmem:[%s216] sm:$0x1]
        %v443 = vsel %vm313, %v373, 0.0
        %v444 = vsel %vm313, %v376, 0.0
        %v445 = vadd.f32 %v443, %v444
        %v446 = vsel %vm313, %v381, 0.0
        %v447 = vadd.f32 %v445, %v446
        %v448 = vsel %vm313, %v384, 0.0
        %v449 = vadd.f32 %v447, %v448
        %v450 = vsel %vm313, %v389, 0.0
        %v451 = vadd.f32 %v449, %v450
        %v452 = vsel %vm313, %v392, 0.0
        %v453 = vadd.f32 %v451, %v452
        %v454 = vsel %vm313, %v397, 0.0
        %v455 = vadd.f32 %v453, %v454
        %v456 = vsel %vm313, %v400, 0.0
        %v457 = vadd.f32 %v455, %v456
        %v458 = vsel %vm313, %v405, 0.0
        %v459 = vadd.f32 %v457, %v458
        %v460 = vsel %vm313, %v408, 0.0
        %v461 = vadd.f32 %v459, %v460
        %v462 = vsel %vm313, %v413, 0.0
        %v463 = vadd.f32 %v461, %v462
        %v464 = vsel %vm313, %v416, 0.0
        %v465 = vadd.f32 %v463, %v464
        %v466 = vsel %vm313, %v421, 0.0
        %v467 = vadd.f32 %v465, %v466
        %v468 = vsel %vm313, %v424, 0.0
        %v469 = vadd.f32 %v467, %v468
        %v470 = vsel %vm313, %v429, 0.0
        %v471 = vadd.f32 %v469, %v470
        %v472 = vsel %vm313, %v432, 0.0
        %v473 = vadd.f32 %v471, %v472
        %v474 = vrot.slane %v473, 4
        %v475 = vadd.f32 %v473, %v474
        %v476 = vrot.slane %v475, 2
        %v477 = vadd.f32 %v475, %v476
        %v478 = vrot.slane %v477, 1
        %v479 = vadd.f32 %v477, %v478
        %v480 = vadd.f32 %v442, %v479
        %vm481 = vcmask 253952
        %482 = vst.msk [vmem:[%s216] sm:$0x1] %vm481, %v480
        %v483 = vld [vmem:[%s222] sm:$0x1]
        %v484 = vmul.f32 %v373, %v373
        %v485 = vmul.f32 %v376, %v376
        %v486 = vmul.f32 %v381, %v381
        %v487 = vmul.f32 %v384, %v384
        %v488 = vmul.f32 %v389, %v389
        %v489 = vmul.f32 %v392, %v392
        %v490 = vmul.f32 %v397, %v397
        %v491 = vmul.f32 %v400, %v400
        %v492 = vmul.f32 %v405, %v405
        %v493 = vmul.f32 %v408, %v408
        %v494 = vmul.f32 %v413, %v413
        %v495 = vmul.f32 %v416, %v416
        %v496 = vmul.f32 %v421, %v421
        %v497 = vmul.f32 %v424, %v424
        %v498 = vmul.f32 %v429, %v429
        %v499 = vmul.f32 %v432, %v432
        %v500 = vsel %vm313, %v484, 0.0
        %v501 = vsel %vm313, %v485, 0.0
        %v502 = vadd.f32 %v500, %v501
        %v503 = vsel %vm313, %v486, 0.0
        %v504 = vadd.f32 %v502, %v503
        %v505 = vsel %vm313, %v487, 0.0
        %v506 = vadd.f32 %v504, %v505
        %v507 = vsel %vm313, %v488, 0.0
        %v508 = vadd.f32 %v506, %v507
        %v509 = vsel %vm313, %v489, 0.0
        %v510 = vadd.f32 %v508, %v509
        %v511 = vsel %vm313, %v490, 0.0
        %v512 = vadd.f32 %v510, %v511
        %v513 = vsel %vm313, %v491, 0.0
        %v514 = vadd.f32 %v512, %v513
        %v515 = vsel %vm313, %v492, 0.0
        %v516 = vadd.f32 %v514, %v515
        %v517 = vsel %vm313, %v493, 0.0
        %v518 = vadd.f32 %v516, %v517
        %v519 = vsel %vm313, %v494, 0.0
        %v520 = vadd.f32 %v518, %v519
        %v521 = vsel %vm313, %v495, 0.0
        %v522 = vadd.f32 %v520, %v521
        %v523 = vsel %vm313, %v496, 0.0
        %v524 = vadd.f32 %v522, %v523
        %v525 = vsel %vm313, %v497, 0.0
        %v526 = vadd.f32 %v524, %v525
        %v527 = vsel %vm313, %v498, 0.0
        %v528 = vadd.f32 %v526, %v527
        %v529 = vsel %vm313, %v499, 0.0
        %v530 = vadd.f32 %v528, %v529
        %v531 = vrot.slane %v530, 4
        %v532 = vadd.f32 %v530, %v531
        %v533 = vrot.slane %v532, 2
        %v534 = vadd.f32 %v532, %v533
        %v535 = vrot.slane %v534, 1
        %v536 = vadd.f32 %v534, %v535
        %v537 = vadd.f32 %v483, %v536
        %538 = vst.msk [vmem:[%s222] sm:$0x1] %vm481, %v537
        %s539 = sand.u32 %s112, 1
        %s540 = scalar_lea.sflag [#allocation3], %s539
        %s541 = sand.u32 %s112, 1
        %s542 = scalar_lea.vmem [#allocation2], %s541
        %s543 = sand.u32 %s138, 1
        %s544 = scalar_lea.sflag [#allocation5], %s543
        %s545 = sand.u32 %s138, 1
        %s546 = scalar_lea.vmem [#allocation4], %s545
        // Predicated region
        $region37: #{tpu_custom_call.1} parent=31 // pred_check
          %p547 = pneg %p122
        $region38: #{tpu_custom_call.1} parent=31 // pred_check_branch
          %549 = sbr.rel (%p547) target = $region40
        $region39: #{tpu_custom_call.1} parent=31 // pred_region
          %s551 = ssub.s32 16, 16
          %552 = vsyncadd %s540, %s551
          %s553 = smul.addr %s26, 16
          %s554 = scalar_lea.hbm %s3, %s553
          %s556 = sshll.u32 %s542, 4
          %s557 = int_to_ptr.vmem [resolvable:$true] %s556
          %559 = dma.vmem_to_hbm [thread:$0]  %s557, 16, %s554, %s540
        $region40: #{tpu_custom_call.1} parent=31 // pred_fallthru
          _
        // Predicated region
        $region41: #{tpu_custom_call.1} parent=31 // pred_check
          %p560 = pneg %p148
        $region42: #{tpu_custom_call.1} parent=31 // pred_check_branch
          %562 = sbr.rel (%p560) target = $region44
        $region43: #{tpu_custom_call.1} parent=31 // pred_region
          %s564 = ssub.s32 16, 16
          %565 = vsyncadd %s544, %s564
          %s566 = smul.addr %s26, 16
          %s567 = scalar_lea.hbm %s4, %s566
          %s569 = sshll.u32 %s546, 4
          %s570 = int_to_ptr.vmem [resolvable:$true] %s569
          %572 = dma.vmem_to_hbm [thread:$0]  %s570, 16, %s567, %s544
        $region44: #{tpu_custom_call.1} parent=31 // pred_fallthru
          _
      $region32: #{tpu_custom_call.1} parent=5 // pred_fallthru
        _
      %p573 = scmp.le.s32.totalorder 2, %s17
      // Predicated region
      $region45: #{tpu_custom_call.1} parent=5 // pred_check
        %p574 = pneg %p573
      $region46: #{tpu_custom_call.1} parent=5 // pred_check_branch
        %576 = sbr.rel (%p574) target = $region48
      $region47: #{tpu_custom_call.1} parent=5 // pred_region
        %s577 = ssub.s32 %s17, 2
        // Predicated region
        $region49: #{tpu_custom_call.1} parent=47 // pred_check
          %p578 = pneg %p128
        $region50: #{tpu_custom_call.1} parent=47 // pred_check_branch
          %580 = sbr.rel (%p578) target = $region52
        $region51: #{tpu_custom_call.1} parent=47 // pred_region
          %s581 = sand.u32 %s113, 1
          %s582 = scalar_lea.sflag [#allocation3], %s581
          %s583 = sand.u32 %s113, 1
          %s584 = scalar_lea.vmem [#allocation2], %s583
          %585 = dma.done %s582, 16
        $region52: #{tpu_custom_call.1} parent=47 // pred_fallthru
          _
        // Predicated region
        $region53: #{tpu_custom_call.1} parent=47 // pred_check
          %p586 = pneg %p154
        $region54: #{tpu_custom_call.1} parent=47 // pred_check_branch
          %588 = sbr.rel (%p586) target = $region56
        $region55: #{tpu_custom_call.1} parent=47 // pred_region
          %s589 = sand.u32 %s139, 1
          %s590 = scalar_lea.sflag [#allocation5], %s589
          %s591 = sand.u32 %s139, 1
          %s592 = scalar_lea.vmem [#allocation4], %s591
          %593 = dma.done %s590, 16
        $region56: #{tpu_custom_call.1} parent=47 // pred_fallthru
          _
      $region48: #{tpu_custom_call.1} parent=5 // pred_fallthru
        _
    $region6: #{tpu_custom_call.1} parent=1 // loop_footer
      %s21 = sadd.s32 1, %s17
    $region7: #{tpu_custom_call.1} parent=1 // loop_footer_branch
      %16 = sbr.rel target = $region3
    $region8: #{tpu_custom_call.1} parent=1 // loop_exit
      _
    %594 = vsyncpa [#allocation3], 1
    %s595 = scalar_lea.sflag [#allocation3], 1
    %596 = vsyncpa %s595, 1
    %597 = vsyncpa [#allocation5], 1
    %s598 = scalar_lea.sflag [#allocation5], 1
    %599 = vsyncpa %s598, 1

</llo_original>
